<compile_context>
chip_gen: v6e
topology: v6e:2x2x1
jax: 0.10.0
libtpu: 0.0.40
codegen_flags: <defaults>
</compile_context>

<pallas_src>
import functools

import jax
import jax.numpy as jnp
from jax.experimental import pallas as pl
from jax.experimental.pallas import tpu as pltpu

LN_EPS = 1e-5  # torch.nn.LayerNorm default eps

# Column layout of the packed per-layer vector array (shape (d_in, VEC_COLS)).
_B0, _G0, _BE0, _B1, _G1, _BE1, _B2, _G2, _BE2, _W3, _B3 = range(11)
VEC_COLS = 16


def _round_up(x, m):
    return (x + m - 1) // m * m


def mlp_kernel(a_ref, fT_ref, embT_ref, w0_ref, w1_ref, w2_ref, vecs_ref, o_ref,
               *, emb_dim, feat_dim, nb_pad):
    """One batch tile. Activations are (features, TB): batch on the lane axis."""
    d_in = 2 * emb_dim + feat_dim
    d_half = d_in // 2
    tb = o_ref.shape[-1]

    # ---- fused embedding lookup (one-hot matmul) + concat -------------------
    a = a_ref[...]                                            # (2, TB) int32
    ids = jax.lax.broadcasted_iota(jnp.int32, (nb_pad, tb), 0)
    oh1 = jnp.where(ids == a[0:1, :], 1.0, 0.0).astype(jnp.float32)   # (NBp, TB)
    oh2 = jnp.where(ids == a[1:2, :], 1.0, 0.0).astype(jnp.float32)
    embT = embT_ref[...]                                      # (emb, NBp)
    e1 = jnp.dot(embT, oh1, preferred_element_type=jnp.float32)       # (emb, TB)
    e2 = jnp.dot(embT, oh2, preferred_element_type=jnp.float32)
    x = jnp.concatenate([e1, e2, fT_ref[...]], axis=0)        # (d_in, TB)

    vecs = vecs_ref[...]                                      # (d_in, VEC_COLS)

    # ---- Linear + LayerNorm + ReLU block (dropout = eval-mode identity) -----
    def lin_ln_relu(h, w_ref, d_out, b_col, g_col, be_col):
        # Torch Linear(out,in) weight applied on the left: (d_out,d_k)@(d_k,TB).
        h = jnp.dot(w_ref[...], h, preferred_element_type=jnp.float32)
        h = h + vecs[0:d_out, b_col:b_col + 1]
        mu = jnp.mean(h, axis=0, keepdims=True)               # LN over features
        var = jnp.mean((h - mu) ** 2, axis=0, keepdims=True)
        h = (h - mu) * jax.lax.rsqrt(var + LN_EPS)
        h = h * vecs[0:d_out, g_col:g_col + 1] + vecs[0:d_out, be_col:be_col + 1]
        return jnp.maximum(h, 0.0)

    h = lin_ln_relu(x, w0_ref, d_in, _B0, _G0, _BE0)          # (32, TB)
    h = lin_ln_relu(h, w1_ref, d_in, _B1, _G1, _BE1)          # (32, TB)
    h = lin_ln_relu(h, w2_ref, d_half, _B2, _G2, _BE2)        # (16, TB)

    # ---- final Linear(d_half, 1): VPU mul + sublane reduce -> lane-dense row
    w3 = vecs[0:d_half, _W3:_W3 + 1]                          # (16, 1)
    b3 = vecs[0:1, _B3:_B3 + 1]                               # (1, 1)
    o_ref[...] = jnp.sum(h * w3, axis=0, keepdims=True) + b3  # (1, TB)


def _pack_vectors(params, d_in):
    """Pack biases / LN params / final-layer params into one (d_in, 16) array."""
    cols = {
        _B0: params["b0"], _G0: params["g0"], _BE0: params["be0"],
        _B1: params["b1"], _G1: params["g1"], _BE1: params["be1"],
        _B2: params["b2"], _G2: params["g2"], _BE2: params["be2"],
        _W3: params["w3"], _B3: params["b3"],
    }
    vecs = jnp.zeros((d_in, VEC_COLS), jnp.float32)
    for col, v in cols.items():
        v = jnp.asarray(v, jnp.float32).reshape(-1)
        vecs = vecs.at[: v.shape[0], col].set(v)
    return vecs


@functools.partial(jax.jit, static_argnames=("block_b",))
def mlp_with_authors_forward(authors, feats, params, *, block_b=1024):
    """authors: (2, B) int; feats: (B, feat_dim) f32. Returns (B,) f32."""
    nb, emb_dim = params["emb"].shape
    B, feat_dim = feats.shape
    d_in = 2 * emb_dim + feat_dim

    tb = _round_up(min(block_b, _round_up(B, 128)), 128)
    b_pad = _round_up(B, tb)
    n_tiles = b_pad // tb

    # Pad batch to a multiple of TB and put the batch dim on the lane axis.
    a_pad = jnp.zeros((2, b_pad), jnp.int32).at[:, :B].set(authors.astype(jnp.int32))
    fT = jnp.zeros((feat_dim, b_pad), jnp.float32).at[:, :B].set(
        jnp.asarray(feats, jnp.float32).T)

    nb_pad = _round_up(nb, 8)
    embT = jnp.zeros((emb_dim, nb_pad), jnp.float32).at[:, :nb].set(
        jnp.asarray(params["emb"], jnp.float32).T)

    vecs = _pack_vectors(params, d_in)
    w0 = jnp.asarray(params["w0"], jnp.float32)   # torch layout (out, in)
    w1 = jnp.asarray(params["w1"], jnp.float32)
    w2 = jnp.asarray(params["w2"], jnp.float32)

    kernel = functools.partial(mlp_kernel, emb_dim=emb_dim, feat_dim=feat_dim,
                               nb_pad=nb_pad)

    out = pl.pallas_call(
        kernel,
        out_shape=jax.ShapeDtypeStruct((1, b_pad), jnp.float32),
        grid_spec=pltpu.PrefetchScalarGridSpec(
            num_scalar_prefetch=0,
            grid=(n_tiles,),
            in_specs=[
                pl.BlockSpec((2, tb), lambda i: (0, i)),          # author ids
                pl.BlockSpec((feat_dim, tb), lambda i: (0, i)),   # feats^T tile
                pl.BlockSpec(embT.shape, lambda i: (0, 0)),       # emb^T (resident)
                pl.BlockSpec(w0.shape, lambda i: (0, 0)),         # W0 (resident)
                pl.BlockSpec(w1.shape, lambda i: (0, 0)),         # W1 (resident)
                pl.BlockSpec(w2.shape, lambda i: (0, 0)),         # W2 (resident)
                pl.BlockSpec(vecs.shape, lambda i: (0, 0)),       # packed vectors
            ],
            out_specs=pl.BlockSpec((1, tb), lambda i: (0, i)),    # lane-dense out
        ),
        compiler_params=pltpu.CompilerParams(
            dimension_semantics=("parallel",)),
    )(a_pad, fT, embT, w0, w1, w2, vecs)

    return out[0, :B]   # matches torch .squeeze() -> (B,)


def init_params(key, nb_authors=10, emb_dim=8, feat_dim=16):
    in_size = 2 * emb_dim + feat_dim  # 32
    ks = jax.random.split(key, 5)

    def lin(k, d_in, d_out, scale=0.1):
        w = (scale * jax.random.normal(k, (d_out, d_in))).astype(jnp.float32)  # torch (out,in)
        b = jnp.zeros((d_out,), jnp.float32)
        return w, b

    emb = jax.random.normal(ks[0], (nb_authors, emb_dim)).astype(jnp.float32)
    w0, b0 = lin(ks[1], in_size, in_size)
    w1, b1 = lin(ks[2], in_size, in_size)
    w2, b2 = lin(ks[3], in_size, in_size // 2)
    w3, b3 = lin(ks[4], in_size // 2, 1)
    return dict(
        emb=emb,
        w0=w0, b0=b0, g0=jnp.ones((in_size,), jnp.float32), be0=jnp.zeros((in_size,), jnp.float32),
        w1=w1, b1=b1, g1=jnp.ones((in_size,), jnp.float32), be1=jnp.zeros((in_size,), jnp.float32),
        w2=w2, b2=b2, g2=jnp.ones((in_size // 2,), jnp.float32), be2=jnp.zeros((in_size // 2,), jnp.float32),
        w3=w3, b3=b3,
    )


def reference_forward(authors, feats, params):
    """Pure-JAX mirror of the PyTorch module (eval mode)."""
    a1, a2 = authors[0], authors[1]
    x = jnp.concatenate([params["emb"][a1], params["emb"][a2], feats], axis=1)

    def block(h, w, b, g, be):
        h = jnp.dot(h, w.T, precision=jax.lax.Precision.HIGHEST) + b
        mu = jnp.mean(h, axis=-1, keepdims=True)
        var = jnp.mean((h - mu) ** 2, axis=-1, keepdims=True)
        h = (h - mu) * jax.lax.rsqrt(var + LN_EPS) * g + be
        return jnp.maximum(h, 0.0)

    h = block(x, params["w0"], params["b0"], params["g0"], params["be0"])
    h = block(h, params["w1"], params["b1"], params["g1"], params["be1"])
    h = block(h, params["w2"], params["b2"], params["g2"], params["be2"])
    out = jnp.dot(h, params["w3"].T, precision=jax.lax.Precision.HIGHEST) + params["b3"]
    return jnp.squeeze(out)


if __name__ == "__main__":
    key = jax.random.PRNGKey(0)
    k_auth, k_feat, k_param = jax.random.split(key, 3)

    B, FEAT, NB_AUTHORS, EMB = 8, 16, 10, 8
    authors = jax.random.randint(k_auth, (2, B), 0, NB_AUTHORS, dtype=jnp.int32)
    feats = jax.random.normal(k_feat, (B, FEAT), dtype=jnp.float32)
    params = init_params(k_param, nb_authors=NB_AUTHORS, emb_dim=EMB, feat_dim=FEAT)

    out = jax.block_until_ready(mlp_with_authors_forward(authors, feats, params))
    ref = jax.block_until_ready(reference_forward(authors, feats, params))

    assert out.shape == (B,), out.shape
    assert jnp.allclose(out, ref, atol=1e-4, rtol=1e-4), (out, ref)
    print("KERNEL_OK")
</pallas_src>

<mosaic_0001>
module attributes {stable_mosaic.version = 11 : i64} {
  func.func @mlp_kernel(%arg0: i32, %arg1: memref<2x128xi32, #tpu.memory_space<vmem>>, %arg2: memref<16x128xf32, #tpu.memory_space<vmem>>, %arg3: memref<8x16xf32, #tpu.memory_space<vmem>>, %arg4: memref<32x32xf32, #tpu.memory_space<vmem>>, %arg5: memref<32x32xf32, #tpu.memory_space<vmem>>, %arg6: memref<16x32xf32, #tpu.memory_space<vmem>>, %arg7: memref<32x16xf32, #tpu.memory_space<vmem>>, %arg8: memref<1x128xf32, #tpu.memory_space<vmem>>) attributes {dimension_semantics = [#tpu.dimension_semantics<parallel>], iteration_bounds = array<i64: 1>, scalar_prefetch = 0 : i64, scratch_operands = 0 : i64, tpu.core_type = #tpu.core_type<tc>, window_params = [{transform_indices = @transform_0, window_bounds = array<i64: 2, 128>}, {transform_indices = @transform_1, window_bounds = array<i64: 16, 128>}, {pipeline_mode = #tpu.pipeline_mode<synchronous>, transform_indices = @transform_2, window_bounds = array<i64: 8, 16>}, {pipeline_mode = #tpu.pipeline_mode<synchronous>, transform_indices = @transform_3, window_bounds = array<i64: 32, 32>}, {pipeline_mode = #tpu.pipeline_mode<synchronous>, transform_indices = @transform_4, window_bounds = array<i64: 32, 32>}, {pipeline_mode = #tpu.pipeline_mode<synchronous>, transform_indices = @transform_5, window_bounds = array<i64: 16, 32>}, {pipeline_mode = #tpu.pipeline_mode<synchronous>, transform_indices = @transform_6, window_bounds = array<i64: 32, 16>}, {transform_indices = @transform_7, window_bounds = array<i64: 1, 128>}]} {
    %c0 = arith.constant 0 : index
    %c0_0 = arith.constant 0 : index
    %0 = vector.load %arg1[%c0, %c0_0] : memref<2x128xi32, #tpu.memory_space<vmem>>, vector<2x128xi32>
    %1 = tpu.iota {dimensions = array<i32: 0>} : vector<16x128xi32>
    %2 = vector.extract_strided_slice %0 {offsets = [0, 0], sizes = [1, 128], strides = [1, 1]} : vector<2x128xi32> to vector<1x128xi32>
    %3 = vector.broadcast %2 : vector<1x128xi32> to vector<16x128xi32>
    %4 = arith.cmpi eq, %1, %3 : vector<16x128xi32>
    %cst = arith.constant 1.000000e+00 : f32
    %cst_1 = arith.constant 0.000000e+00 : f32
    %5 = vector.broadcast %cst : f32 to vector<16x128xf32>
    %6 = vector.broadcast %cst_1 : f32 to vector<16x128xf32>
    %7 = arith.select %4, %5, %6 : vector<16x128xi1>, vector<16x128xf32>
    %8 = vector.extract_strided_slice %0 {offsets = [1, 0], sizes = [1, 128], strides = [1, 1]} : vector<2x128xi32> to vector<1x128xi32>
    %9 = vector.broadcast %8 : vector<1x128xi32> to vector<16x128xi32>
    %10 = arith.cmpi eq, %1, %9 : vector<16x128xi32>
    %cst_2 = arith.constant 1.000000e+00 : f32
    %cst_3 = arith.constant 0.000000e+00 : f32
    %11 = vector.broadcast %cst_2 : f32 to vector<16x128xf32>
    %12 = vector.broadcast %cst_3 : f32 to vector<16x128xf32>
    %13 = arith.select %10, %11, %12 : vector<16x128xi1>, vector<16x128xf32>
    %c0_4 = arith.constant 0 : index
    %c0_5 = arith.constant 0 : index
    %14 = vector.load %arg3[%c0_4, %c0_5] : memref<8x16xf32, #tpu.memory_space<vmem>>, vector<8x16xf32>
    %cst_6 = arith.constant dense<0.000000e+00> : vector<8x128xf32>
    %15 = tpu.matmul %14, %7, %cst_6 {dimension_numbers = #tpu.dot_dimension_numbers<[1], [0], [0], [1], [0, 0, 1, 1], [], []>} : vector<8x16xf32>, vector<16x128xf32>, vector<8x128xf32> -> vector<8x128xf32>
    %cst_7 = arith.constant dense<0.000000e+00> : vector<8x128xf32>
    %16 = tpu.matmul %14, %13, %cst_7 {dimension_numbers = #tpu.dot_dimension_numbers<[1], [0], [0], [1], [0, 0, 1, 1], [], []>} : vector<8x16xf32>, vector<16x128xf32>, vector<8x128xf32> -> vector<8x128xf32>
    %c0_8 = arith.constant 0 : index
    %c0_9 = arith.constant 0 : index
    %17 = vector.load %arg2[%c0_8, %c0_9] : memref<16x128xf32, #tpu.memory_space<vmem>>, vector<16x128xf32>
    %18 = tpu.concatenate %15, %16, %17 in 0 : vector<8x128xf32>, vector<8x128xf32>, vector<16x128xf32> -> vector<32x128xf32>
    %c0_10 = arith.constant 0 : index
    %c0_11 = arith.constant 0 : index
    %19 = vector.load %arg7[%c0_10, %c0_11] : memref<32x16xf32, #tpu.memory_space<vmem>>, vector<32x16xf32>
    %c0_12 = arith.constant 0 : index
    %c0_13 = arith.constant 0 : index
    %20 = vector.load %arg4[%c0_12, %c0_13] : memref<32x32xf32, #tpu.memory_space<vmem>>, vector<32x32xf32>
    %cst_14 = arith.constant dense<0.000000e+00> : vector<32x128xf32>
    %21 = tpu.matmul %20, %18, %cst_14 {dimension_numbers = #tpu.dot_dimension_numbers<[1], [0], [0], [1], [0, 0, 1, 1], [], []>} : vector<32x32xf32>, vector<32x128xf32>, vector<32x128xf32> -> vector<32x128xf32>
    %22 = vector.extract_strided_slice %19 {offsets = [0, 0], sizes = [32, 1], strides = [1, 1]} : vector<32x16xf32> to vector<32x1xf32>
    %23 = vector.broadcast %22 : vector<32x1xf32> to vector<32x128xf32>
    %24 = arith.addf %21, %23 : vector<32x128xf32>
    %cst_15 = arith.constant dense<0.000000e+00> : vector<128xf32>
    %25 = vector.multi_reduction <add>, %24, %cst_15 [0] : vector<32x128xf32> to vector<128xf32>
    %26 = vector.shape_cast %25 : vector<128xf32> to vector<1x128xf32>
    %cst_16 = arith.constant 3.200000e+01 : f32
    %27 = vector.broadcast %cst_16 : f32 to vector<1x128xf32>
    %28 = arith.divf %26, %27 : vector<1x128xf32>
    %29 = vector.broadcast %28 : vector<1x128xf32> to vector<32x128xf32>
    %30 = arith.subf %24, %29 : vector<32x128xf32>
    %31 = arith.mulf %30, %30 : vector<32x128xf32>
    %cst_17 = arith.constant dense<0.000000e+00> : vector<128xf32>
    %32 = vector.multi_reduction <add>, %31, %cst_17 [0] : vector<32x128xf32> to vector<128xf32>
    %33 = vector.shape_cast %32 : vector<128xf32> to vector<1x128xf32>
    %cst_18 = arith.constant 3.200000e+01 : f32
    %34 = vector.broadcast %cst_18 : f32 to vector<1x128xf32>
    %35 = arith.divf %33, %34 : vector<1x128xf32>
    %36 = vector.broadcast %28 : vector<1x128xf32> to vector<32x128xf32>
    %37 = arith.subf %24, %36 : vector<32x128xf32>
    %cst_19 = arith.constant 9.99999974E-6 : f32
    %38 = vector.broadcast %cst_19 : f32 to vector<1x128xf32>
    %39 = arith.addf %35, %38 : vector<1x128xf32>
    %40 = math.rsqrt %39 : vector<1x128xf32>
    %41 = vector.broadcast %40 : vector<1x128xf32> to vector<32x128xf32>
    %42 = arith.mulf %37, %41 : vector<32x128xf32>
    %43 = vector.extract_strided_slice %19 {offsets = [0, 1], sizes = [32, 1], strides = [1, 1]} : vector<32x16xf32> to vector<32x1xf32>
    %44 = vector.broadcast %43 : vector<32x1xf32> to vector<32x128xf32>
    %45 = arith.mulf %42, %44 : vector<32x128xf32>
    %46 = vector.extract_strided_slice %19 {offsets = [0, 2], sizes = [32, 1], strides = [1, 1]} : vector<32x16xf32> to vector<32x1xf32>
    %47 = vector.broadcast %46 : vector<32x1xf32> to vector<32x128xf32>
    %48 = arith.addf %45, %47 : vector<32x128xf32>
    %cst_20 = arith.constant 0.000000e+00 : f32
    %49 = vector.broadcast %cst_20 : f32 to vector<32x128xf32>
    %50 = arith.maximumf %48, %49 : vector<32x128xf32>
    %c0_21 = arith.constant 0 : index
    %c0_22 = arith.constant 0 : index
    %51 = vector.load %arg5[%c0_21, %c0_22] : memref<32x32xf32, #tpu.memory_space<vmem>>, vector<32x32xf32>
    %cst_23 = arith.constant dense<0.000000e+00> : vector<32x128xf32>
    %52 = tpu.matmul %51, %50, %cst_23 {dimension_numbers = #tpu.dot_dimension_numbers<[1], [0], [0], [1], [0, 0, 1, 1], [], []>} : vector<32x32xf32>, vector<32x128xf32>, vector<32x128xf32> -> vector<32x128xf32>
    %53 = vector.extract_strided_slice %19 {offsets = [0, 3], sizes = [32, 1], strides = [1, 1]} : vector<32x16xf32> to vector<32x1xf32>
    %54 = vector.broadcast %53 : vector<32x1xf32> to vector<32x128xf32>
    %55 = arith.addf %52, %54 : vector<32x128xf32>
    %cst_24 = arith.constant dense<0.000000e+00> : vector<128xf32>
    %56 = vector.multi_reduction <add>, %55, %cst_24 [0] : vector<32x128xf32> to vector<128xf32>
    %57 = vector.shape_cast %56 : vector<128xf32> to vector<1x128xf32>
    %cst_25 = arith.constant 3.200000e+01 : f32
    %58 = vector.broadcast %cst_25 : f32 to vector<1x128xf32>
    %59 = arith.divf %57, %58 : vector<1x128xf32>
    %60 = vector.broadcast %59 : vector<1x128xf32> to vector<32x128xf32>
    %61 = arith.subf %55, %60 : vector<32x128xf32>
    %62 = arith.mulf %61, %61 : vector<32x128xf32>
    %cst_26 = arith.constant dense<0.000000e+00> : vector<128xf32>
    %63 = vector.multi_reduction <add>, %62, %cst_26 [0] : vector<32x128xf32> to vector<128xf32>
    %64 = vector.shape_cast %63 : vector<128xf32> to vector<1x128xf32>
    %cst_27 = arith.constant 3.200000e+01 : f32
    %65 = vector.broadcast %cst_27 : f32 to vector<1x128xf32>
    %66 = arith.divf %64, %65 : vector<1x128xf32>
    %67 = vector.broadcast %59 : vector<1x128xf32> to vector<32x128xf32>
    %68 = arith.subf %55, %67 : vector<32x128xf32>
    %cst_28 = arith.constant 9.99999974E-6 : f32
    %69 = vector.broadcast %cst_28 : f32 to vector<1x128xf32>
    %70 = arith.addf %66, %69 : vector<1x128xf32>
    %71 = math.rsqrt %70 : vector<1x128xf32>
    %72 = vector.broadcast %71 : vector<1x128xf32> to vector<32x128xf32>
    %73 = arith.mulf %68, %72 : vector<32x128xf32>
    %74 = vector.extract_strided_slice %19 {offsets = [0, 4], sizes = [32, 1], strides = [1, 1]} : vector<32x16xf32> to vector<32x1xf32>
    %75 = vector.broadcast %74 : vector<32x1xf32> to vector<32x128xf32>
    %76 = arith.mulf %73, %75 : vector<32x128xf32>
    %77 = vector.extract_strided_slice %19 {offsets = [0, 5], sizes = [32, 1], strides = [1, 1]} : vector<32x16xf32> to vector<32x1xf32>
    %78 = vector.broadcast %77 : vector<32x1xf32> to vector<32x128xf32>
    %79 = arith.addf %76, %78 : vector<32x128xf32>
    %cst_29 = arith.constant 0.000000e+00 : f32
    %80 = vector.broadcast %cst_29 : f32 to vector<32x128xf32>
    %81 = arith.maximumf %79, %80 : vector<32x128xf32>
    %c0_30 = arith.constant 0 : index
    %c0_31 = arith.constant 0 : index
    %82 = vector.load %arg6[%c0_30, %c0_31] : memref<16x32xf32, #tpu.memory_space<vmem>>, vector<16x32xf32>
    %cst_32 = arith.constant dense<0.000000e+00> : vector<16x128xf32>
    %83 = tpu.matmul %82, %81, %cst_32 {dimension_numbers = #tpu.dot_dimension_numbers<[1], [0], [0], [1], [0, 0, 1, 1], [], []>} : vector<16x32xf32>, vector<32x128xf32>, vector<16x128xf32> -> vector<16x128xf32>
    %84 = vector.extract_strided_slice %19 {offsets = [0, 6], sizes = [16, 1], strides = [1, 1]} : vector<32x16xf32> to vector<16x1xf32>
    %85 = vector.broadcast %84 : vector<16x1xf32> to vector<16x128xf32>
    %86 = arith.addf %83, %85 : vector<16x128xf32>
    %cst_33 = arith.constant dense<0.000000e+00> : vector<128xf32>
    %87 = vector.multi_reduction <add>, %86, %cst_33 [0] : vector<16x128xf32> to vector<128xf32>
    %88 = vector.shape_cast %87 : vector<128xf32> to vector<1x128xf32>
    %cst_34 = arith.constant 1.600000e+01 : f32
    %89 = vector.broadcast %cst_34 : f32 to vector<1x128xf32>
    %90 = arith.divf %88, %89 : vector<1x128xf32>
    %91 = vector.broadcast %90 : vector<1x128xf32> to vector<16x128xf32>
    %92 = arith.subf %86, %91 : vector<16x128xf32>
    %93 = arith.mulf %92, %92 : vector<16x128xf32>
    %cst_35 = arith.constant dense<0.000000e+00> : vector<128xf32>
    %94 = vector.multi_reduction <add>, %93, %cst_35 [0] : vector<16x128xf32> to vector<128xf32>
    %95 = vector.shape_cast %94 : vector<128xf32> to vector<1x128xf32>
    %cst_36 = arith.constant 1.600000e+01 : f32
    %96 = vector.broadcast %cst_36 : f32 to vector<1x128xf32>
    %97 = arith.divf %95, %96 : vector<1x128xf32>
    %98 = vector.broadcast %90 : vector<1x128xf32> to vector<16x128xf32>
    %99 = arith.subf %86, %98 : vector<16x128xf32>
    %cst_37 = arith.constant 9.99999974E-6 : f32
    %100 = vector.broadcast %cst_37 : f32 to vector<1x128xf32>
    %101 = arith.addf %97, %100 : vector<1x128xf32>
    %102 = math.rsqrt %101 : vector<1x128xf32>
    %103 = vector.broadcast %102 : vector<1x128xf32> to vector<16x128xf32>
    %104 = arith.mulf %99, %103 : vector<16x128xf32>
    %105 = vector.extract_strided_slice %19 {offsets = [0, 7], sizes = [16, 1], strides = [1, 1]} : vector<32x16xf32> to vector<16x1xf32>
    %106 = vector.broadcast %105 : vector<16x1xf32> to vector<16x128xf32>
    %107 = arith.mulf %104, %106 : vector<16x128xf32>
    %108 = vector.extract_strided_slice %19 {offsets = [0, 8], sizes = [16, 1], strides = [1, 1]} : vector<32x16xf32> to vector<16x1xf32>
    %109 = vector.broadcast %108 : vector<16x1xf32> to vector<16x128xf32>
    %110 = arith.addf %107, %109 : vector<16x128xf32>
    %cst_38 = arith.constant 0.000000e+00 : f32
    %111 = vector.broadcast %cst_38 : f32 to vector<16x128xf32>
    %112 = arith.maximumf %110, %111 : vector<16x128xf32>
    %113 = vector.extract_strided_slice %19 {offsets = [0, 9], sizes = [16, 1], strides = [1, 1]} : vector<32x16xf32> to vector<16x1xf32>
    %114 = vector.extract_strided_slice %19 {offsets = [0, 10], sizes = [1, 1], strides = [1, 1]} : vector<32x16xf32> to vector<1x1xf32>
    %115 = vector.broadcast %113 : vector<16x1xf32> to vector<16x128xf32>
    %116 = arith.mulf %112, %115 : vector<16x128xf32>
    %cst_39 = arith.constant dense<0.000000e+00> : vector<128xf32>
    %117 = vector.multi_reduction <add>, %116, %cst_39 [0] : vector<16x128xf32> to vector<128xf32>
    %118 = vector.shape_cast %117 : vector<128xf32> to vector<1x128xf32>
    %119 = vector.broadcast %114 : vector<1x1xf32> to vector<1x128xf32>
    %120 = arith.addf %118, %119 : vector<1x128xf32>
    %c0_40 = arith.constant 0 : index
    %c0_41 = arith.constant 0 : index
    %121 = vector.load %arg8[%c0_40, %c0_41] : memref<1x128xf32, #tpu.memory_space<vmem>>, vector<1x128xf32>
    tpu.vector_store %arg8[%c0_40, %c0_41], %120 {strides = array<i32>} : memref<1x128xf32, #tpu.memory_space<vmem>>, vector<1x128xf32>,
    return
  }
  func.func @transform_0(%arg0: i32) -> (i32, i32) {
    %c0_i32 = arith.constant 0 : i32
    %c0_i32_0 = arith.constant 0 : i32
    return %c0_i32, %arg0 : i32, i32
  }
  func.func @transform_1(%arg0: i32) -> (i32, i32) {
    %c0_i32 = arith.constant 0 : i32
    %c0_i32_0 = arith.constant 0 : i32
    return %c0_i32, %arg0 : i32, i32
  }
  func.func @transform_2(%arg0: i32) -> (i32, i32) {
    %c0_i32 = arith.constant 0 : i32
    %c0_i32_0 = arith.constant 0 : i32
    %c0_i32_1 = arith.constant 0 : i32
    return %c0_i32, %c0_i32_0 : i32, i32
  }
  func.func @transform_3(%arg0: i32) -> (i32, i32) {
    %c0_i32 = arith.constant 0 : i32
    %c0_i32_0 = arith.constant 0 : i32
    %c0_i32_1 = arith.constant 0 : i32
    return %c0_i32, %c0_i32_0 : i32, i32
  }
  func.func @transform_4(%arg0: i32) -> (i32, i32) {
    %c0_i32 = arith.constant 0 : i32
    %c0_i32_0 = arith.constant 0 : i32
    %c0_i32_1 = arith.constant 0 : i32
    return %c0_i32, %c0_i32_0 : i32, i32
  }
  func.func @transform_5(%arg0: i32) -> (i32, i32) {
    %c0_i32 = arith.constant 0 : i32
    %c0_i32_0 = arith.constant 0 : i32
    %c0_i32_1 = arith.constant 0 : i32
    return %c0_i32, %c0_i32_0 : i32, i32
  }
  func.func @transform_6(%arg0: i32) -> (i32, i32) {
    %c0_i32 = arith.constant 0 : i32
    %c0_i32_0 = arith.constant 0 : i32
    %c0_i32_1 = arith.constant 0 : i32
    return %c0_i32, %c0_i32_0 : i32, i32
  }
  func.func @transform_7(%arg0: i32) -> (i32, i32) {
    %c0_i32 = arith.constant 0 : i32
    %c0_i32_0 = arith.constant 0 : i32
    return %c0_i32, %arg0 : i32, i32
  }
}

</mosaic_0001>

<llo_original>
// kernel: mlp_with_authors_forward.1
$region0: #{mlp_with_authors_forward.1}
  #allocation0 [shape = 'u32[]', space=smem, size = 0x4, offset = 0x4, fixed_abs, tag = 'smem constant byte address 0x4 - core index']
  #allocation1 [shape = 'u32[144,128]{1,0:T(1,128)}', space=vmem, size = 0x12000, scoped, tag = 'internal scratch']
  %s0 = inlined_call_operand.vmem [shape: s32[2,128], index: 0, kind: input, shape index: {}]
  %s1 = inlined_call_operand.vmem [shape: f32[16,128], index: 1, kind: input, shape index: {}]
  %s2 = inlined_call_operand.vmem [shape: f32[8,16], index: 2, kind: input, shape index: {}]
  %s3 = inlined_call_operand.vmem [shape: f32[32,32], index: 3, kind: input, shape index: {}]
  %s4 = inlined_call_operand.vmem [shape: f32[32,32], index: 4, kind: input, shape index: {}]
  %s5 = inlined_call_operand.vmem [shape: f32[16,32], index: 5, kind: input, shape index: {}]
  %s6 = inlined_call_operand.vmem [shape: f32[32,16], index: 6, kind: input, shape index: {}]
  %s7 = inlined_call_operand.vmem [shape: f32[1,128], index: 7, kind: output, shape index: {}]
  %s8 = sld [smem:[#allocation0]]
  $region38: #{mlp_with_authors_forward.1} parent=0
    _
  %s10 = ssub.s32 1, %s8
  %s11 = scalar_select 0, %s10, %s8
  // Predicated region
  $region2: #{mlp_with_authors_forward.1} parent=0 // pred_check
    _
  $region3: #{mlp_with_authors_forward.1} parent=0 // pred_check_branch
    %13 = sbr.rel (0) target = $region5
  $region4: #{mlp_with_authors_forward.1} parent=0 // pred_region
    _
  $region5: #{mlp_with_authors_forward.1} parent=0 // pred_fallthru
    _
  // Predicated region
  $region6: #{mlp_with_authors_forward.1} parent=0 // pred_check
    _
  $region7: #{mlp_with_authors_forward.1} parent=0 // pred_check_branch
    %15 = sbr.rel (0) target = $region9
  $region8: #{mlp_with_authors_forward.1} parent=0 // pred_region
    _
  $region9: #{mlp_with_authors_forward.1} parent=0 // pred_fallthru
    _
  // Predicated region
  $region10: #{mlp_with_authors_forward.1} parent=0 // pred_check
    _
  $region11: #{mlp_with_authors_forward.1} parent=0 // pred_check_branch
    %17 = sbr.rel (0) target = $region13
  $region12: #{mlp_with_authors_forward.1} parent=0 // pred_region
    _
  $region13: #{mlp_with_authors_forward.1} parent=0 // pred_fallthru
    _
  // Predicated region
  $region14: #{mlp_with_authors_forward.1} parent=0 // pred_check
    _
  $region15: #{mlp_with_authors_forward.1} parent=0 // pred_check_branch
    %19 = sbr.rel (0) target = $region17
  $region16: #{mlp_with_authors_forward.1} parent=0 // pred_region
    _
  $region17: #{mlp_with_authors_forward.1} parent=0 // pred_fallthru
    _
  // Predicated region
  $region18: #{mlp_with_authors_forward.1} parent=0 // pred_check
    _
  $region19: #{mlp_with_authors_forward.1} parent=0 // pred_check_branch
    %21 = sbr.rel (0) target = $region21
  $region20: #{mlp_with_authors_forward.1} parent=0 // pred_region
    _
  $region21: #{mlp_with_authors_forward.1} parent=0 // pred_fallthru
    _
  // Predicated region
  $region22: #{mlp_with_authors_forward.1} parent=0 // pred_check
    _
  $region23: #{mlp_with_authors_forward.1} parent=0 // pred_check_branch
    %23 = sbr.rel (0) target = $region25
  $region24: #{mlp_with_authors_forward.1} parent=0 // pred_region
    _
  $region25: #{mlp_with_authors_forward.1} parent=0 // pred_fallthru
    _
  // Predicated region
  $region26: #{mlp_with_authors_forward.1} parent=0 // pred_check
    _
  $region27: #{mlp_with_authors_forward.1} parent=0 // pred_check_branch
    %25 = sbr.rel (0) target = $region29
  $region28: #{mlp_with_authors_forward.1} parent=0 // pred_region
    _
  $region29: #{mlp_with_authors_forward.1} parent=0 // pred_fallthru
    _
  %v26 = vld [vmem:[%s0] sm:$0x3]
  %v27 = vlaneseq
  %v28 = vshrl.u32 %v27, 7
  %v29 = vadd.s32 %v28, 8
  %v30 = vlaneseq
  %v31 = vshrl.u32 %v30, 7
  %v32 = vsub.s32 0, %v31
  %v33 = vrot.slane %v26, %v32
  %vm34 = vcmp.eq.s32.totalorder %v28, %v33
  %vm35 = vcmp.eq.s32.totalorder %v29, %v33
  %v36 = vsel %vm34, 1.0, 0.0
  %v37 = vsel %vm35, 1.0, 0.0
  %v38 = vlaneseq
  %v39 = vshrl.u32 %v38, 7
  %v40 = vsub.s32 1, %v39
  %v41 = vrot.slane %v26, %v40
  %vm42 = vcmp.eq.s32.totalorder %v28, %v41
  %vm43 = vcmp.eq.s32.totalorder %v29, %v41
  %v44 = vsel %vm42, 1.0, 0.0
  %v45 = vsel %vm43, 1.0, 0.0
  %v46 = vld [vmem:[%s2] sm:$0xff]
  %vm47 = vcmask 130048
  %v49 = vsel %vm47, %v46, 0
  %51 = vmatprep.subr.mxu0 0.0
  %52 = vmatpush1.msra.mxu0 0.0
  %53 = vmatprep.subr.mxu0 0.0
  %54 = vmatpush1.msra.mxu0 0.0
  %55 = vmatprep.subr.mxu0 0.0
  %56 = vmatpush1.msra.mxu0 0.0
  %57 = vmatprep.subr.mxu0 0.0
  %58 = vmatpush1.msra.mxu0 0.0
  %59 = vmatprep.subr.mxu0 0.0
  %60 = vmatpush1.msra.mxu0 0.0
  %61 = vmatprep.subr.mxu0 0.0
  %62 = vmatpush1.msra.mxu0 0.0
  %63 = vmatprep.subr.mxu0 0.0
  %64 = vmatpush1.msra.mxu0 0.0
  %65 = vmatprep.subr.mxu0 0.0
  %66 = vmatpush1.msra.mxu0 0.0
  %67 = vmatprep.subr.mxu0 0.0
  %68 = vmatpush1.msra.mxu0 0.0
  %69 = vmatprep.subr.mxu0 0.0
  %70 = vmatpush1.msra.mxu0 0.0
  %71 = vmatprep.subr.mxu0 0.0
  %72 = vmatpush1.msra.mxu0 0.0
  %73 = vmatprep.subr.mxu0 0.0
  %74 = vmatpush1.msra.mxu0 0.0
  %75 = vmatprep.subr.mxu0 0.0
  %76 = vmatpush1.msra.mxu0 0.0
  %77 = vmatprep.subr.mxu0 0.0
  %78 = vmatpush1.msra.mxu0 0.0
  %79 = vmatprep.subr.mxu0 0.0
  %80 = vmatpush1.msra.mxu0 %v37
  %81 = vmatprep.subr.mxu0 0.0
  %82 = vmatpush1.msra.mxu0 %v36
  %83 = vmatprep.subr.mxu0 0.0
  %84 = vmatpush2.msra.mxu0 0.0
  %85 = vmatprep.subr.mxu0 0.0
  %86 = vmatpush2.msra.mxu0 0.0
  %87 = vmatprep.subr.mxu0 0.0
  %88 = vmatpush2.msra.mxu0 0.0
  %89 = vmatprep.subr.mxu0 0.0
  %90 = vmatpush2.msra.mxu0 0.0
  %91 = vmatprep.subr.mxu0 0.0
  %92 = vmatpush2.msra.mxu0 0.0
  %93 = vmatprep.subr.mxu0 0.0
  %94 = vmatpush2.msra.mxu0 0.0
  %95 = vmatprep.subr.mxu0 0.0
  %96 = vmatpush2.msra.mxu0 0.0
  %97 = vmatprep.subr.mxu0 0.0
  %98 = vmatpush2.msra.mxu0 0.0
  %99 = vmatprep.subr.mxu0 0.0
  %100 = vmatpush2.msra.mxu0 0.0
  %101 = vmatprep.subr.mxu0 0.0
  %102 = vmatpush2.msra.mxu0 0.0
  %103 = vmatprep.subr.mxu0 0.0
  %104 = vmatpush2.msra.mxu0 0.0
  %105 = vmatprep.subr.mxu0 0.0
  %106 = vmatpush2.msra.mxu0 0.0
  %107 = vmatprep.subr.mxu0 0.0
  %108 = vmatpush2.msra.mxu0 0.0
  %109 = vmatprep.subr.mxu0 0.0
  %110 = vmatpush2.msra.mxu0 0.0
  %111 = vmatprep.subr.mxu0 0.0
  %112 = vmatpush2.msra.mxu0 0.0
  %113 = vmatprep.subr.mxu0 0.0
  %114 = vmatpush2.msra.mxu0 0.0
  %115 = vmatprep.mubr.f32.mxu0 0.0
  %116 = vmatmul.mubr.f32.gmra.mxu0 %v49
  %v117 = vpop.f32.mrf.mxu0
  %v118 = vadd.f32 0.0, %v117
  %v119 = vpop.f32.mrf.mxu0
  %120 = vdwg.mxu0
  %121 = vmatprep.subr.mxu0 0.0
  %122 = vmatpush1.msra.mxu0 0.0
  %123 = vmatprep.subr.mxu0 0.0
  %124 = vmatpush1.msra.mxu0 0.0
  %125 = vmatprep.subr.mxu0 0.0
  %126 = vmatpush1.msra.mxu0 0.0
  %127 = vmatprep.subr.mxu0 0.0
  %128 = vmatpush1.msra.mxu0 0.0
  %129 = vmatprep.subr.mxu0 0.0
  %130 = vmatpush1.msra.mxu0 0.0
  %131 = vmatprep.subr.mxu0 0.0
  %132 = vmatpush1.msra.mxu0 0.0
  %133 = vmatprep.subr.mxu0 0.0
  %134 = vmatpush1.msra.mxu0 0.0
  %135 = vmatprep.subr.mxu0 0.0
  %136 = vmatpush1.msra.mxu0 0.0
  %137 = vmatprep.subr.mxu0 0.0
  %138 = vmatpush1.msra.mxu0 0.0
  %139 = vmatprep.subr.mxu0 0.0
  %140 = vmatpush1.msra.mxu0 0.0
  %141 = vmatprep.subr.mxu0 0.0
  %142 = vmatpush1.msra.mxu0 0.0
  %143 = vmatprep.subr.mxu0 0.0
  %144 = vmatpush1.msra.mxu0 0.0
  %145 = vmatprep.subr.mxu0 0.0
  %146 = vmatpush1.msra.mxu0 0.0
  %147 = vmatprep.subr.mxu0 0.0
  %148 = vmatpush1.msra.mxu0 0.0
  %149 = vmatprep.subr.mxu0 0.0
  %150 = vmatpush1.msra.mxu0 %v45
  %151 = vmatprep.subr.mxu0 0.0
  %152 = vmatpush1.msra.mxu0 %v44
  %153 = vmatprep.subr.mxu0 0.0
  %154 = vmatpush2.msra.mxu0 0.0
  %155 = vmatprep.subr.mxu0 0.0
  %156 = vmatpush2.msra.mxu0 0.0
  %157 = vmatprep.subr.mxu0 0.0
  %158 = vmatpush2.msra.mxu0 0.0
  %159 = vmatprep.subr.mxu0 0.0
  %160 = vmatpush2.msra.mxu0 0.0
  %161 = vmatprep.subr.mxu0 0.0
  %162 = vmatpush2.msra.mxu0 0.0
  %163 = vmatprep.subr.mxu0 0.0
  %164 = vmatpush2.msra.mxu0 0.0
  %165 = vmatprep.subr.mxu0 0.0
  %166 = vmatpush2.msra.mxu0 0.0
  %167 = vmatprep.subr.mxu0 0.0
  %168 = vmatpush2.msra.mxu0 0.0
  %169 = vmatprep.subr.mxu0 0.0
  %170 = vmatpush2.msra.mxu0 0.0
  %171 = vmatprep.subr.mxu0 0.0
  %172 = vmatpush2.msra.mxu0 0.0
  %173 = vmatprep.subr.mxu0 0.0
  %174 = vmatpush2.msra.mxu0 0.0
  %175 = vmatprep.subr.mxu0 0.0
  %176 = vmatpush2.msra.mxu0 0.0
  %177 = vmatprep.subr.mxu0 0.0
  %178 = vmatpush2.msra.mxu0 0.0
  %179 = vmatprep.subr.mxu0 0.0
  %180 = vmatpush2.msra.mxu0 0.0
  %181 = vmatprep.subr.mxu0 0.0
  %182 = vmatpush2.msra.mxu0 0.0
  %183 = vmatprep.subr.mxu0 0.0
  %184 = vmatpush2.msra.mxu0 0.0
  %185 = vmatprep.mubr.f32.mxu0 0.0
  %186 = vmatmul.mubr.f32.gmra.mxu0 %v49
  %v187 = vpop.f32.mrf.mxu0
  %v188 = vadd.f32 0.0, %v187
  %v189 = vpop.f32.mrf.mxu0
  %190 = vdwg.mxu0
  %v191 = vld [vmem:[%s1] sm:$0xff]
  %v192 = vld [vmem:[%s1 + $0x8] sm:$0xff]
  %v193 = vld [vmem:[%s6] sm:$0xff]
  %v194 = vld [vmem:[%s6 + $0x8] sm:$0xff]
  %v195 = vld [vmem:[%s6 + $0x10] sm:$0xff]
  %v196 = vld [vmem:[%s6 + $0x18] sm:$0xff]
  %v197 = vld [vmem:[%s3] sm:$0xff]
  %v198 = vld [vmem:[%s3 + $0x8] sm:$0xff]
  %v199 = vld [vmem:[%s3 + $0x10] sm:$0xff]
  %v200 = vld [vmem:[%s3 + $0x18] sm:$0xff]
  %202 = vset.pattern.permute.xlu0 0
  %203 = vperm.xlu0 %202, %v193
  %v204 = vpop.permute.xlu0 %203
  %207 = vset.pattern.permute.xlu0 0
  %208 = vperm.xlu0 %207, %v194
  %v209 = vpop.permute.xlu0 %208
  %212 = vset.pattern.permute.xlu0 0
  %213 = vperm.xlu0 %212, %v195
  %v214 = vpop.permute.xlu0 %213
  %217 = vset.pattern.permute.xlu0 0
  %218 = vperm.xlu0 %217, %v196
  %v219 = vpop.permute.xlu0 %218
  %vm221 = vcmask 261120
  %v223 = vsel %vm221, %v197, 0
  %v226 = vsel %vm221, %v198, 0
  %v229 = vsel %vm221, %v199, 0
  %v232 = vsel %vm221, %v200, 0
  %234 = vmatprep.subr.mxu0 0.0
  %235 = vmatpush1.msra.mxu0 0.0
  %236 = vmatprep.subr.mxu0 0.0
  %237 = vmatpush1.msra.mxu0 0.0
  %238 = vmatprep.subr.mxu0 0.0
  %239 = vmatpush1.msra.mxu0 0.0
  %240 = vmatprep.subr.mxu0 0.0
  %241 = vmatpush1.msra.mxu0 0.0
  %242 = vmatprep.subr.mxu0 0.0
  %243 = vmatpush1.msra.mxu0 0.0
  %244 = vmatprep.subr.mxu0 0.0
  %245 = vmatpush1.msra.mxu0 0.0
  %246 = vmatprep.subr.mxu0 0.0
  %247 = vmatpush1.msra.mxu0 0.0
  %248 = vmatprep.subr.mxu0 0.0
  %249 = vmatpush1.msra.mxu0 0.0
  %250 = vmatprep.subr.mxu0 0.0
  %251 = vmatpush1.msra.mxu0 0.0
  %252 = vmatprep.subr.mxu0 0.0
  %253 = vmatpush1.msra.mxu0 0.0
  %254 = vmatprep.subr.mxu0 0.0
  %255 = vmatpush1.msra.mxu0 0.0
  %256 = vmatprep.subr.mxu0 0.0
  %257 = vmatpush1.msra.mxu0 0.0
  %258 = vmatprep.subr.mxu0 0.0
  %259 = vmatpush1.msra.mxu0 %v192
  %260 = vmatprep.subr.mxu0 0.0
  %261 = vmatpush1.msra.mxu0 %v191
  %262 = vmatprep.subr.mxu0 0.0
  %263 = vmatpush1.msra.mxu0 %v188
  %264 = vmatprep.subr.mxu0 0.0
  %265 = vmatpush1.msra.mxu0 %v118
  %266 = vmatprep.subr.mxu0 0.0
  %267 = vmatpush2.msra.mxu0 0.0
  %268 = vmatprep.subr.mxu0 0.0
  %269 = vmatpush2.msra.mxu0 0.0
  %270 = vmatprep.subr.mxu0 0.0
  %271 = vmatpush2.msra.mxu0 0.0
  %272 = vmatprep.subr.mxu0 0.0
  %273 = vmatpush2.msra.mxu0 0.0
  %274 = vmatprep.subr.mxu0 0.0
  %275 = vmatpush2.msra.mxu0 0.0
  %276 = vmatprep.subr.mxu0 0.0
  %277 = vmatpush2.msra.mxu0 0.0
  %278 = vmatprep.subr.mxu0 0.0
  %279 = vmatpush2.msra.mxu0 0.0
  %280 = vmatprep.subr.mxu0 0.0
  %281 = vmatpush2.msra.mxu0 0.0
  %282 = vmatprep.subr.mxu0 0.0
  %283 = vmatpush2.msra.mxu0 0.0
  %284 = vmatprep.subr.mxu0 0.0
  %285 = vmatpush2.msra.mxu0 0.0
  %286 = vmatprep.subr.mxu0 0.0
  %287 = vmatpush2.msra.mxu0 0.0
  %288 = vmatprep.subr.mxu0 0.0
  %289 = vmatpush2.msra.mxu0 0.0
  %290 = vmatprep.subr.mxu0 0.0
  %291 = vmatpush2.msra.mxu0 0.0
  %292 = vmatprep.subr.mxu0 0.0
  %293 = vmatpush2.msra.mxu0 0.0
  %294 = vmatprep.subr.mxu0 0.0
  %295 = vmatpush2.msra.mxu0 0.0
  %296 = vmatprep.subr.mxu0 0.0
  %297 = vmatpush2.msra.mxu0 0.0
  %298 = vmatprep.mubr.f32.mxu0 0.0
  %299 = vmatmul.mubr.f32.gmra.mxu0 %v223
  %v300 = vpop.f32.mrf.mxu0
  %v301 = vadd.f32 %v204, %v300
  %v302 = vpop.f32.mrf.mxu0
  %303 = vmatprep.mubr.f32.mxu0 0.0
  %304 = vmatmul.mubr.f32.gmra.mxu0 %v226
  %v305 = vpop.f32.mrf.mxu0
  %v306 = vadd.f32 %v209, %v305
  %v307 = vpop.f32.mrf.mxu0
  %308 = vmatprep.mubr.f32.mxu0 0.0
  %309 = vmatmul.mubr.f32.gmra.mxu0 %v229
  %v310 = vpop.f32.mrf.mxu0
  %v311 = vadd.f32 %v214, %v310
  %v312 = vpop.f32.mrf.mxu0
  %313 = vmatprep.mubr.f32.mxu0 0.0
  %314 = vmatmul.mubr.f32.gmra.mxu0 %v232
  %v315 = vpop.f32.mrf.mxu0
  %v316 = vadd.f32 %v219, %v315
  %v317 = vpop.f32.mrf.mxu0
  %318 = vdwg.mxu0
  %v319 = vadd.f32 %v301, %v306
  %v320 = vadd.f32 %v319, %v311
  %v321 = vadd.f32 %v320, %v316
  %v322 = vrot.slane %v321, 4
  %v323 = vadd.f32 %v321, %v322
  %v324 = vrot.slane %v323, 2
  %v325 = vadd.f32 %v323, %v324
  %v326 = vrot.slane %v325, 1
  %v327 = vadd.f32 %v325, %v326
  %v328 = vrcp.pop 32.0
  %v329 = vmul.f32 %v327, %v328
  %v330 = vsub.f32 %v301, %v329
  %v331 = vsub.f32 %v306, %v329
  %v332 = vsub.f32 %v311, %v329
  %v333 = vsub.f32 %v316, %v329
  %v334 = vmul.f32 %v330, %v330
  %v335 = vmul.f32 %v331, %v331
  %v336 = vmul.f32 %v332, %v332
  %v337 = vmul.f32 %v333, %v333
  %v338 = vadd.f32 %v334, %v335
  %v339 = vadd.f32 %v338, %v336
  %v340 = vadd.f32 %v339, %v337
  %v341 = vrot.slane %v340, 4
  %v342 = vadd.f32 %v340, %v341
  %v343 = vrot.slane %v342, 2
  %v344 = vadd.f32 %v342, %v343
  %v345 = vrot.slane %v344, 1
  %v346 = vadd.f32 %v344, %v345
  %v347 = vmul.f32 %v346, %v328
  %v348 = vadd.f32 %v347, 1e-05
  %v349 = vrsqrt.pop %v348
  %v350 = vmul.f32 %v330, %v349
  %v351 = vmul.f32 %v331, %v349
  %v352 = vmul.f32 %v332, %v349
  %v353 = vmul.f32 %v333, %v349
  %354 = vset.pattern.permute.xlu0 1
  %355 = vperm.xlu0 %354, %v193
  %v356 = vpop.permute.xlu0 %355
  %358 = vset.pattern.permute.xlu0 1
  %359 = vperm.xlu0 %358, %v194
  %v360 = vpop.permute.xlu0 %359
  %362 = vset.pattern.permute.xlu0 1
  %363 = vperm.xlu0 %362, %v195
  %v364 = vpop.permute.xlu0 %363
  %366 = vset.pattern.permute.xlu0 1
  %367 = vperm.xlu0 %366, %v196
  %v368 = vpop.permute.xlu0 %367
  %v370 = vmul.f32 %v350, %v356
  %v371 = vmul.f32 %v351, %v360
  %v372 = vmul.f32 %v352, %v364
  %v373 = vmul.f32 %v353, %v368
  %374 = vset.pattern.permute.xlu0 2
  %375 = vperm.xlu0 %374, %v193
  %v376 = vpop.permute.xlu0 %375
  %378 = vset.pattern.permute.xlu0 2
  %379 = vperm.xlu0 %378, %v194
  %v380 = vpop.permute.xlu0 %379
  %382 = vset.pattern.permute.xlu0 2
  %383 = vperm.xlu0 %382, %v195
  %v384 = vpop.permute.xlu0 %383
  %386 = vset.pattern.permute.xlu0 2
  %387 = vperm.xlu0 %386, %v196
  %v388 = vpop.permute.xlu0 %387
  %v390 = vadd.f32 %v370, %v376
  %v391 = vadd.f32 %v371, %v380
  %v392 = vadd.f32 %v372, %v384
  %v393 = vadd.f32 %v373, %v388
  %v394 = vmax.f32 %v390, 0.0
  %v395 = vmax.f32 %v391, 0.0
  %v396 = vmax.f32 %v392, 0.0
  %v397 = vmax.f32 %v393, 0.0
  %v398 = vld [vmem:[%s4] sm:$0xff]
  %v399 = vld [vmem:[%s4 + $0x8] sm:$0xff]
  %v400 = vld [vmem:[%s4 + $0x10] sm:$0xff]
  %v401 = vld [vmem:[%s4 + $0x18] sm:$0xff]
  %402 = vset.pattern.permute.xlu0 3
  %403 = vperm.xlu0 %402, %v193
  %v404 = vpop.permute.xlu0 %403
  %406 = vset.pattern.permute.xlu0 3
  %407 = vperm.xlu0 %406, %v194
  %v408 = vpop.permute.xlu0 %407
  %410 = vset.pattern.permute.xlu0 3
  %411 = vperm.xlu0 %410, %v195
  %v412 = vpop.permute.xlu0 %411
  %414 = vset.pattern.permute.xlu0 3
  %415 = vperm.xlu0 %414, %v196
  %v416 = vpop.permute.xlu0 %415
  %v419 = vsel %vm221, %v398, 0
  %v422 = vsel %vm221, %v399, 0
  %v425 = vsel %vm221, %v400, 0
  %v428 = vsel %vm221, %v401, 0
  %430 = vmatprep.subr.mxu0 0.0
  %431 = vmatpush1.msra.mxu0 0.0
  %432 = vmatprep.subr.mxu0 0.0
  %433 = vmatpush1.msra.mxu0 0.0
  %434 = vmatprep.subr.mxu0 0.0
  %435 = vmatpush1.msra.mxu0 0.0
  %436 = vmatprep.subr.mxu0 0.0
  %437 = vmatpush1.msra.mxu0 0.0
  %438 = vmatprep.subr.mxu0 0.0
  %439 = vmatpush1.msra.mxu0 0.0
  %440 = vmatprep.subr.mxu0 0.0
  %441 = vmatpush1.msra.mxu0 0.0
  %442 = vmatprep.subr.mxu0 0.0
  %443 = vmatpush1.msra.mxu0 0.0
  %444 = vmatprep.subr.mxu0 0.0
  %445 = vmatpush1.msra.mxu0 0.0
  %446 = vmatprep.subr.mxu0 0.0
  %447 = vmatpush1.msra.mxu0 0.0
  %448 = vmatprep.subr.mxu0 0.0
  %449 = vmatpush1.msra.mxu0 0.0
  %450 = vmatprep.subr.mxu0 0.0
  %451 = vmatpush1.msra.mxu0 0.0
  %452 = vmatprep.subr.mxu0 0.0
  %453 = vmatpush1.msra.mxu0 0.0
  %454 = vmatprep.subr.mxu0 0.0
  %455 = vmatpush1.msra.mxu0 %v397
  %456 = vmatprep.subr.mxu0 0.0
  %457 = vmatpush1.msra.mxu0 %v396
  %458 = vmatprep.subr.mxu0 0.0
  %459 = vmatpush1.msra.mxu0 %v395
  %460 = vmatprep.subr.mxu0 0.0
  %461 = vmatpush1.msra.mxu0 %v394
  %462 = vmatprep.subr.mxu0 0.0
  %463 = vmatpush2.msra.mxu0 0.0
  %464 = vmatprep.subr.mxu0 0.0
  %465 = vmatpush2.msra.mxu0 0.0
  %466 = vmatprep.subr.mxu0 0.0
  %467 = vmatpush2.msra.mxu0 0.0
  %468 = vmatprep.subr.mxu0 0.0
  %469 = vmatpush2.msra.mxu0 0.0
  %470 = vmatprep.subr.mxu0 0.0
  %471 = vmatpush2.msra.mxu0 0.0
  %472 = vmatprep.subr.mxu0 0.0
  %473 = vmatpush2.msra.mxu0 0.0
  %474 = vmatprep.subr.mxu0 0.0
  %475 = vmatpush2.msra.mxu0 0.0
  %476 = vmatprep.subr.mxu0 0.0
  %477 = vmatpush2.msra.mxu0 0.0
  %478 = vmatprep.subr.mxu0 0.0
  %479 = vmatpush2.msra.mxu0 0.0
  %480 = vmatprep.subr.mxu0 0.0
  %481 = vmatpush2.msra.mxu0 0.0
  %482 = vmatprep.subr.mxu0 0.0
  %483 = vmatpush2.msra.mxu0 0.0
  %484 = vmatprep.subr.mxu0 0.0
  %485 = vmatpush2.msra.mxu0 0.0
  %486 = vmatprep.subr.mxu0 0.0
  %487 = vmatpush2.msra.mxu0 0.0
  %488 = vmatprep.subr.mxu0 0.0
  %489 = vmatpush2.msra.mxu0 0.0
  %490 = vmatprep.subr.mxu0 0.0
  %491 = vmatpush2.msra.mxu0 0.0
  %492 = vmatprep.subr.mxu0 0.0
  %493 = vmatpush2.msra.mxu0 0.0
  %494 = vmatprep.mubr.f32.mxu0 0.0
  %495 = vmatmul.mubr.f32.gmra.mxu0 %v419
  %v496 = vpop.f32.mrf.mxu0
  %v497 = vadd.f32 %v404, %v496
  %v498 = vpop.f32.mrf.mxu0
  %499 = vmatprep.mubr.f32.mxu0 0.0
  %500 = vmatmul.mubr.f32.gmra.mxu0 %v422
  %v501 = vpop.f32.mrf.mxu0
  %v502 = vadd.f32 %v408, %v501
  %v503 = vpop.f32.mrf.mxu0
  %504 = vmatprep.mubr.f32.mxu0 0.0
  %505 = vmatmul.mubr.f32.gmra.mxu0 %v425
  %v506 = vpop.f32.mrf.mxu0
  %v507 = vadd.f32 %v412, %v506
  %v508 = vpop.f32.mrf.mxu0
  %509 = vmatprep.mubr.f32.mxu0 0.0
  %510 = vmatmul.mubr.f32.gmra.mxu0 %v428
  %v511 = vpop.f32.mrf.mxu0
  %v512 = vadd.f32 %v416, %v511
  %v513 = vpop.f32.mrf.mxu0
  %514 = vdwg.mxu0
  %v515 = vadd.f32 %v497, %v502
  %v516 = vadd.f32 %v515, %v507
  %v517 = vadd.f32 %v516, %v512
  %v518 = vrot.slane %v517, 4
  %v519 = vadd.f32 %v517, %v518
  %v520 = vrot.slane %v519, 2
  %v521 = vadd.f32 %v519, %v520
  %v522 = vrot.slane %v521, 1
  %v523 = vadd.f32 %v521, %v522
  %v524 = vmul.f32 %v523, %v328
  %v525 = vsub.f32 %v497, %v524
  %v526 = vsub.f32 %v502, %v524
  %v527 = vsub.f32 %v507, %v524
  %v528 = vsub.f32 %v512, %v524
  %v529 = vmul.f32 %v525, %v525
  %v530 = vmul.f32 %v526, %v526
  %v531 = vmul.f32 %v527, %v527
  %v532 = vmul.f32 %v528, %v528
  %v533 = vadd.f32 %v529, %v530
  %v534 = vadd.f32 %v533, %v531
  %v535 = vadd.f32 %v534, %v532
  %v536 = vrot.slane %v535, 4
  %v537 = vadd.f32 %v535, %v536
  %v538 = vrot.slane %v537, 2
  %v539 = vadd.f32 %v537, %v538
  %v540 = vrot.slane %v539, 1
  %v541 = vadd.f32 %v539, %v540
  %v542 = vmul.f32 %v541, %v328
  %v543 = vadd.f32 %v542, 1e-05
  %v544 = vrsqrt.pop %v543
  %v545 = vmul.f32 %v525, %v544
  %v546 = vmul.f32 %v526, %v544
  %v547 = vmul.f32 %v527, %v544
  %v548 = vmul.f32 %v528, %v544
  %549 = vset.pattern.permute.xlu0 4
  %550 = vperm.xlu0 %549, %v193
  %v551 = vpop.permute.xlu0 %550
  %553 = vset.pattern.permute.xlu0 4
  %554 = vperm.xlu0 %553, %v194
  %v555 = vpop.permute.xlu0 %554
  %557 = vset.pattern.permute.xlu0 4
  %558 = vperm.xlu0 %557, %v195
  %v559 = vpop.permute.xlu0 %558
  %561 = vset.pattern.permute.xlu0 4
  %562 = vperm.xlu0 %561, %v196
  %v563 = vpop.permute.xlu0 %562
  %v565 = vmul.f32 %v545, %v551
  %v566 = vmul.f32 %v546, %v555
  %v567 = vmul.f32 %v547, %v559
  %v568 = vmul.f32 %v548, %v563
  %569 = vset.pattern.permute.xlu0 5
  %570 = vperm.xlu0 %569, %v193
  %v571 = vpop.permute.xlu0 %570
  %573 = vset.pattern.permute.xlu0 5
  %574 = vperm.xlu0 %573, %v194
  %v575 = vpop.permute.xlu0 %574
  %577 = vset.pattern.permute.xlu0 5
  %578 = vperm.xlu0 %577, %v195
  %v579 = vpop.permute.xlu0 %578
  %581 = vset.pattern.permute.xlu0 5
  %582 = vperm.xlu0 %581, %v196
  %v583 = vpop.permute.xlu0 %582
  %v585 = vadd.f32 %v565, %v571
  %v586 = vadd.f32 %v566, %v575
  %v587 = vadd.f32 %v567, %v579
  %v588 = vadd.f32 %v568, %v583
  %v589 = vmax.f32 %v585, 0.0
  %v590 = vmax.f32 %v586, 0.0
  %v591 = vmax.f32 %v587, 0.0
  %v592 = vmax.f32 %v588, 0.0
  %v593 = vld [vmem:[%s5] sm:$0xff]
  %v594 = vld [vmem:[%s5 + $0x8] sm:$0xff]
  %595 = vset.pattern.permute.xlu0 6
  %596 = vperm.xlu0 %595, %v193
  %v597 = vpop.permute.xlu0 %596
  %599 = vset.pattern.permute.xlu0 6
  %600 = vperm.xlu0 %599, %v194
  %v601 = vpop.permute.xlu0 %600
  %v604 = vsel %vm221, %v593, 0
  %v607 = vsel %vm221, %v594, 0
  %609 = vmatprep.subr.mxu0 0.0
  %610 = vmatpush1.msra.mxu0 0.0
  %611 = vmatprep.subr.mxu0 0.0
  %612 = vmatpush1.msra.mxu0 0.0
  %613 = vmatprep.subr.mxu0 0.0
  %614 = vmatpush1.msra.mxu0 0.0
  %615 = vmatprep.subr.mxu0 0.0
  %616 = vmatpush1.msra.mxu0 0.0
  %617 = vmatprep.subr.mxu0 0.0
  %618 = vmatpush1.msra.mxu0 0.0
  %619 = vmatprep.subr.mxu0 0.0
  %620 = vmatpush1.msra.mxu0 0.0
  %621 = vmatprep.subr.mxu0 0.0
  %622 = vmatpush1.msra.mxu0 0.0
  %623 = vmatprep.subr.mxu0 0.0
  %624 = vmatpush1.msra.mxu0 0.0
  %625 = vmatprep.subr.mxu0 0.0
  %626 = vmatpush1.msra.mxu0 0.0
  %627 = vmatprep.subr.mxu0 0.0
  %628 = vmatpush1.msra.mxu0 0.0
  %629 = vmatprep.subr.mxu0 0.0
  %630 = vmatpush1.msra.mxu0 0.0
  %631 = vmatprep.subr.mxu0 0.0
  %632 = vmatpush1.msra.mxu0 0.0
  %633 = vmatprep.subr.mxu0 0.0
  %634 = vmatpush1.msra.mxu0 %v592
  %635 = vmatprep.subr.mxu0 0.0
  %636 = vmatpush1.msra.mxu0 %v591
  %637 = vmatprep.subr.mxu0 0.0
  %638 = vmatpush1.msra.mxu0 %v590
  %639 = vmatprep.subr.mxu0 0.0
  %640 = vmatpush1.msra.mxu0 %v589
  %641 = vmatprep.subr.mxu0 0.0
  %642 = vmatpush2.msra.mxu0 0.0
  %643 = vmatprep.subr.mxu0 0.0
  %644 = vmatpush2.msra.mxu0 0.0
  %645 = vmatprep.subr.mxu0 0.0
  %646 = vmatpush2.msra.mxu0 0.0
  %647 = vmatprep.subr.mxu0 0.0
  %648 = vmatpush2.msra.mxu0 0.0
  %649 = vmatprep.subr.mxu0 0.0
  %650 = vmatpush2.msra.mxu0 0.0
  %651 = vmatprep.subr.mxu0 0.0
  %652 = vmatpush2.msra.mxu0 0.0
  %653 = vmatprep.subr.mxu0 0.0
  %654 = vmatpush2.msra.mxu0 0.0
  %655 = vmatprep.subr.mxu0 0.0
  %656 = vmatpush2.msra.mxu0 0.0
  %657 = vmatprep.subr.mxu0 0.0
  %658 = vmatpush2.msra.mxu0 0.0
  %659 = vmatprep.subr.mxu0 0.0
  %660 = vmatpush2.msra.mxu0 0.0
  %661 = vmatprep.subr.mxu0 0.0
  %662 = vmatpush2.msra.mxu0 0.0
  %663 = vmatprep.subr.mxu0 0.0
  %664 = vmatpush2.msra.mxu0 0.0
  %665 = vmatprep.subr.mxu0 0.0
  %666 = vmatpush2.msra.mxu0 0.0
  %667 = vmatprep.subr.mxu0 0.0
  %668 = vmatpush2.msra.mxu0 0.0
  %669 = vmatprep.subr.mxu0 0.0
  %670 = vmatpush2.msra.mxu0 0.0
  %671 = vmatprep.subr.mxu0 0.0
  %672 = vmatpush2.msra.mxu0 0.0
  %673 = vmatprep.mubr.f32.mxu0 0.0
  %674 = vmatmul.mubr.f32.gmra.mxu0 %v604
  %v675 = vpop.f32.mrf.mxu0
  %v676 = vadd.f32 %v597, %v675
  %v677 = vpop.f32.mrf.mxu0
  %678 = vmatprep.mubr.f32.mxu0 0.0
  %679 = vmatmul.mubr.f32.gmra.mxu0 %v607
  %v680 = vpop.f32.mrf.mxu0
  %v681 = vadd.f32 %v601, %v680
  %v682 = vpop.f32.mrf.mxu0
  %683 = vdwg.mxu0
  %v684 = vadd.f32 %v676, %v681
  %v685 = vrot.slane %v684, 4
  %v686 = vadd.f32 %v684, %v685
  %v687 = vrot.slane %v686, 2
  %v688 = vadd.f32 %v686, %v687
  %v689 = vrot.slane %v688, 1
  %v690 = vadd.f32 %v688, %v689
  %v691 = vrcp.pop 16.0
  %v692 = vmul.f32 %v690, %v691
  %v693 = vsub.f32 %v676, %v692
  %v694 = vsub.f32 %v681, %v692
  %v695 = vmul.f32 %v693, %v693
  %v696 = vmul.f32 %v694, %v694
  %v697 = vadd.f32 %v695, %v696
  %v698 = vrot.slane %v697, 4
  %v699 = vadd.f32 %v697, %v698
  %v700 = vrot.slane %v699, 2
  %v701 = vadd.f32 %v699, %v700
  %v702 = vrot.slane %v701, 1
  %v703 = vadd.f32 %v701, %v702
  %v704 = vmul.f32 %v703, %v691
  %v705 = vadd.f32 %v704, 1e-05
  %v706 = vrsqrt.pop %v705
  %v707 = vmul.f32 %v693, %v706
  %v708 = vmul.f32 %v694, %v706
  %709 = vset.pattern.permute.xlu0 7
  %710 = vperm.xlu0 %709, %v193
  %v711 = vpop.permute.xlu0 %710
  %713 = vset.pattern.permute.xlu0 7
  %714 = vperm.xlu0 %713, %v194
  %v715 = vpop.permute.xlu0 %714
  %v717 = vmul.f32 %v707, %v711
  %v718 = vmul.f32 %v708, %v715
  %719 = vset.pattern.permute.xlu0 8
  %720 = vperm.xlu0 %719, %v193
  %v721 = vpop.permute.xlu0 %720
  %723 = vset.pattern.permute.xlu0 8
  %724 = vperm.xlu0 %723, %v194
  %v725 = vpop.permute.xlu0 %724
  %v727 = vadd.f32 %v717, %v721
  %v728 = vadd.f32 %v718, %v725
  %v729 = vmax.f32 %v727, 0.0
  %v730 = vmax.f32 %v728, 0.0
  %731 = vset.pattern.permute.xlu0 9
  %732 = vperm.xlu0 %731, %v193
  %v733 = vpop.permute.xlu0 %732
  %735 = vset.pattern.permute.xlu0 9
  %736 = vperm.xlu0 %735, %v194
  %v737 = vpop.permute.xlu0 %736
  %v739 = vmul.f32 %v729, %v733
  %v740 = vmul.f32 %v730, %v737
  %v741 = vadd.f32 %v739, %v740
  %v742 = vrot.slane %v741, 4
  %v743 = vadd.f32 %v741, %v742
  %v744 = vrot.slane %v743, 2
  %v745 = vadd.f32 %v743, %v744
  %v746 = vrot.slane %v745, 1
  %v747 = vadd.f32 %v745, %v746
  %748 = vset.pattern.permute.xlu0 10
  %749 = vperm.xlu0 %748, %v193
  %v750 = vpop.permute.xlu0 %749
  %v752 = vadd.f32 %v747, %v750
  %753 = vst [vmem:[%s7] sm:$0x1] %v752
  // Predicated region
  $region30: #{mlp_with_authors_forward.1} parent=0 // pred_check
    _
  $region31: #{mlp_with_authors_forward.1} parent=0 // pred_check_branch
    %755 = sbr.rel (0) target = $region33
  $region32: #{mlp_with_authors_forward.1} parent=0 // pred_region
    _
  $region33: #{mlp_with_authors_forward.1} parent=0 // pred_fallthru
    _
  // Predicated region
  $region34: #{mlp_with_authors_forward.1} parent=0 // pred_check
    _
  $region35: #{mlp_with_authors_forward.1} parent=0 // pred_check_branch
    %757 = sbr.rel (0) target = $region37
  $region36: #{mlp_with_authors_forward.1} parent=0 // pred_region
    _
  $region37: #{mlp_with_authors_forward.1} parent=0 // pred_fallthru
    _

</llo_original>
